<compile_context>
chip_gen: v6e
topology: v6e:2x2x1
jax: 0.10.0
libtpu: 0.0.40
codegen_flags: <defaults>
</compile_context>

<pallas_src>
import functools

import jax
import jax.numpy as jnp
from jax.experimental import pallas as pl
from jax.experimental.pallas import tpu as pltpu

_C = 16  # padded hidden-channel count (10 -> 16)


def _round_up(v, m):
    return ((v + m - 1) // m) * m


# ---------------------------------------------------------------------------
# Pallas kernel: fused im2col + (matmul/bias/PReLU) x 3, pixels on lanes
# ---------------------------------------------------------------------------
def _make_kernel(k, W, mext_pad):
    # tap t = (kh, kw) of the patch equals the flattened image shifted by off.
    offs = [kh * W + kw for kh in range(k) for kw in range(k)]

    def kernel(scal_ref, x_ref, w1_ref, b1_ref, w2_ref, b2_ref, w3_ref, o_ref):
        a = scal_ref[0]       # shared PReLU slope (num_parameters=1)
        b3 = scal_ref[1]      # conv3 bias (single output channel)

        def prelu(v):
            return jnp.where(v >= 0, v, a * v)

        xr = x_ref[0]         # (1, L_pad): flattened (row-major) image + pad

        # conv1, fused im2col: h[c, m] = sum_t w1[c, t] * x_flat[m + off_t]
        # Each term is a (C,1)*(1,M) broadcast multiply on the VPU; the
        # unaligned lane slice is an XLU shift -- both free under mem-bound.
        h = w1_ref[:, 0:1] * xr[:, offs[0]:offs[0] + mext_pad]
        for t in range(1, len(offs)):
            off = offs[t]
            h = h + w1_ref[:, t:t + 1] * xr[:, off:off + mext_pad]
        h = prelu(h + b1_ref[...])

        # conv2 (1x1 conv == channel matmul): (C, C) @ (C, M) -> (C, M)
        h = jnp.dot(w2_ref[...], h, preferred_element_type=jnp.float32)
        h = prelu(h + b2_ref[...])

        # conv3 (1x1 conv -> 1 channel): (1, C) @ (C, M) -> (1, M)
        y = jnp.dot(w3_ref[...], h, preferred_element_type=jnp.float32)
        o_ref[0] = prelu(y + b3).astype(o_ref.dtype)

    return kernel


def _pallas_pattern_matcher(scal, x2, w1, b1, w2, b2, w3, *, k, W, mext_pad):
    N, _, l_pad = x2.shape

    def const(arr):
        return pl.BlockSpec(arr.shape, lambda n: (0,) * arr.ndim)

    return pl.pallas_call(
        _make_kernel(k, W, mext_pad),
        out_shape=jax.ShapeDtypeStruct((N, 1, mext_pad), jnp.float32),
        grid=(N,),
        in_specs=[
            pl.BlockSpec(memory_space=pltpu.MemorySpace.SMEM),   # alpha, b3
            pl.BlockSpec((1, 1, l_pad), lambda n: (n, 0, 0)),    # image slab
            const(w1), const(b1),
            const(w2), const(b2),
            const(w3),
        ],
        out_specs=pl.BlockSpec((1, 1, mext_pad), lambda n: (n, 0, 0)),
        compiler_params=pltpu.CompilerParams(
            dimension_semantics=("parallel",)),
    )(scal, x2, w1, b1, w2, b2, w3)


# ---------------------------------------------------------------------------
# Parameter setup + forward wrapper (NCHW in / NCHW out)
# ---------------------------------------------------------------------------
def init_params(key, k, dtype=jnp.float32):
    """Deterministic synthetic init matching the PyTorch module's shapes."""
    ks = jax.random.split(key, 6)
    # conv1: (10, 1, k, k), conv2: (10, 10, 1, 1), conv3: (1, 10, 1, 1)
    w1 = jax.random.normal(ks[0], (10, 1, k, k), dtype) * 0.1
    b1 = jax.random.normal(ks[1], (10,), dtype) * 0.1
    w2 = jax.random.normal(ks[2], (10, 10, 1, 1), dtype) * 0.1
    b2 = jax.random.normal(ks[3], (10,), dtype) * 0.1
    w3 = jax.random.normal(ks[4], (1, 10, 1, 1), dtype) * 0.1
    b3 = jax.random.normal(ks[5], (1,), dtype) * 0.1
    alpha = jnp.array(0.25, dtype)  # nn.PReLU() default init
    return dict(w1=w1, b1=b1, w2=w2, b2=b2, w3=w3, b3=b3, alpha=alpha)


@functools.partial(jax.jit, static_argnames=("k",))
def pattern_matcher_forward(x, params, *, k):
    """x: (N, 1, H, W) NCHW float32 -> (N, 1, Ho, Wo)."""
    N, C, H, W = x.shape
    assert C == 1, "PatternMatcher takes a single input channel"
    Ho, Wo = H - k + 1, W - k + 1

    # Extended output grid per image: (Ho, W) -> uniform lane shifts; the
    # right-most (k-1) columns are invalid and sliced off below.
    mext = Ho * W
    mext_pad = _round_up(mext, 128)
    max_off = (k - 1) * (W + 1)
    l_pad = _round_up(max(H * W, mext_pad + max_off), 128)

    # Raw image, per-image row-major flattened (no wrapper-side im2col).
    # TODO(synk): for large images, additionally tile Ho into row blocks so a
    # per-image slab is not required to fit in VMEM (fine at this test size).
    x2 = x.reshape(N, 1, H * W)
    x2 = jnp.pad(x2, ((0, 0), (0, 0), (0, l_pad - H * W)))

    # Flatten conv weights into matmul form; padded channels carry zeros.
    w1 = jnp.pad(params["w1"].reshape(10, k * k), ((0, _C - 10), (0, 0)))
    w2 = jnp.pad(params["w2"].reshape(10, 10), ((0, _C - 10), (0, _C - 10)))
    w3 = jnp.pad(params["w3"].reshape(1, 10), ((0, 0), (0, _C - 10)))
    b1 = jnp.pad(params["b1"].reshape(10, 1), ((0, _C - 10), (0, 0)))
    b2 = jnp.pad(params["b2"].reshape(10, 1), ((0, _C - 10), (0, 0)))
    scal = jnp.concatenate([params["alpha"].reshape(1),
                            params["b3"].reshape(1)]).astype(jnp.float32)

    out = _pallas_pattern_matcher(scal, x2, w1, b1, w2, b2, w3,
                                  k=k, W=W, mext_pad=mext_pad)
    # (N, 1, mext_pad) -> drop lane padding -> (N, Ho, W) -> drop invalid
    # extended columns -> (N, Ho, Wo) -> NCHW.
    y = out[:, 0, :mext].reshape(N, Ho, W)[:, :, :Wo]
    return y[:, None, :, :]


# ---------------------------------------------------------------------------
# Pure-JAX reference (lax.conv) for correctness checking
# ---------------------------------------------------------------------------
def reference_forward(x, params):
    def prelu(v):
        return jnp.where(v >= 0, v, params["alpha"] * v)

    def conv(v, w, b):
        y = jax.lax.conv_general_dilated(
            v, w, window_strides=(1, 1), padding="VALID",
            dimension_numbers=("NCHW", "OIHW", "NCHW"))
        return y + b.reshape(1, -1, 1, 1)

    h = prelu(conv(x, params["w1"], params["b1"]))
    h = prelu(conv(h, params["w2"], params["b2"]))
    h = prelu(conv(h, params["w3"], params["b3"]))
    return h


if __name__ == "__main__":
    key = jax.random.PRNGKey(0)
    kx, kp = jax.random.split(key)

    # Small shapes: batch=2, 1 input channel, 16x16 spatial, kernel=3
    N, H, W, k = 2, 16, 16, 3
    x = jax.random.normal(kx, (N, 1, H, W), jnp.float32)
    params = init_params(kp, k)

    y = pattern_matcher_forward(x, params, k=k)
    y = jax.block_until_ready(y)

    y_ref = reference_forward(x, params)
    assert y.shape == (N, 1, H - k + 1, W - k + 1), y.shape
    assert jnp.allclose(y, y_ref, atol=1e-5, rtol=1e-5), (
        float(jnp.max(jnp.abs(y - y_ref))))

    print("KERNEL_OK")
</pallas_src>

<mosaic_0001>
module attributes {stable_mosaic.version = 11 : i64} {
  func.func @kernel(%arg0: i32, %arg1: memref<2xf32, #tpu.memory_space<smem>>, %arg2: memref<1x1x384xf32, #tpu.memory_space<vmem>>, %arg3: memref<16x9xf32, #tpu.memory_space<vmem>>, %arg4: memref<16x1xf32, #tpu.memory_space<vmem>>, %arg5: memref<16x16xf32, #tpu.memory_space<vmem>>, %arg6: memref<16x1xf32, #tpu.memory_space<vmem>>, %arg7: memref<1x16xf32, #tpu.memory_space<vmem>>, %arg8: memref<1x1x256xf32, #tpu.memory_space<vmem>>) attributes {dimension_semantics = [#tpu.dimension_semantics<parallel>], iteration_bounds = array<i64: 2>, scalar_prefetch = 0 : i64, scratch_operands = 0 : i64, tpu.core_type = #tpu.core_type<tc>, window_params = [{transform_indices = @transform_0, window_bounds = array<i64: 2>}, {transform_indices = @transform_1, window_bounds = array<i64: 1, 1, 384>}, {pipeline_mode = #tpu.pipeline_mode<synchronous>, transform_indices = @transform_2, window_bounds = array<i64: 16, 9>}, {pipeline_mode = #tpu.pipeline_mode<synchronous>, transform_indices = @transform_3, window_bounds = array<i64: 16, 1>}, {pipeline_mode = #tpu.pipeline_mode<synchronous>, transform_indices = @transform_4, window_bounds = array<i64: 16, 16>}, {pipeline_mode = #tpu.pipeline_mode<synchronous>, transform_indices = @transform_5, window_bounds = array<i64: 16, 1>}, {pipeline_mode = #tpu.pipeline_mode<synchronous>, transform_indices = @transform_6, window_bounds = array<i64: 1, 16>}, {transform_indices = @transform_7, window_bounds = array<i64: 1, 1, 256>}]} {
    %c0 = arith.constant 0 : index
    %0 = memref.load %arg1[%c0] : memref<2xf32, #tpu.memory_space<smem>>
    %c1 = arith.constant 1 : index
    %1 = memref.load %arg1[%c1] : memref<2xf32, #tpu.memory_space<smem>>
    %c0_0 = arith.constant 0 : index
    %c0_1 = arith.constant 0 : index
    %c0_2 = arith.constant 0 : index
    %2 = vector.load %arg2[%c0_0, %c0_1, %c0_2] : memref<1x1x384xf32, #tpu.memory_space<vmem>>, vector<1x1x384xf32>
    %3 = vector.shape_cast %2 : vector<1x1x384xf32> to vector<1x384xf32>
    %c0_3 = arith.constant 0 : index
    %c0_4 = arith.constant 0 : index
    %4 = vector.load %arg3[%c0_3, %c0_4] : memref<16x9xf32, #tpu.memory_space<vmem>>, vector<16x1xf32>
    %5 = vector.extract_strided_slice %3 {offsets = [0, 0], sizes = [1, 256], strides = [1, 1]} : vector<1x384xf32> to vector<1x256xf32>
    %6 = vector.broadcast %4 : vector<16x1xf32> to vector<16x256xf32>
    %7 = vector.broadcast %5 : vector<1x256xf32> to vector<16x256xf32>
    %8 = arith.mulf %6, %7 : vector<16x256xf32>
    %c0_5 = arith.constant 0 : index
    %c1_6 = arith.constant 1 : index
    %9 = vector.load %arg3[%c0_5, %c1_6] : memref<16x9xf32, #tpu.memory_space<vmem>>, vector<16x1xf32>
    %10 = vector.extract_strided_slice %3 {offsets = [0, 1], sizes = [1, 256], strides = [1, 1]} : vector<1x384xf32> to vector<1x256xf32>
    %11 = vector.broadcast %9 : vector<16x1xf32> to vector<16x256xf32>
    %12 = vector.broadcast %10 : vector<1x256xf32> to vector<16x256xf32>
    %13 = arith.mulf %11, %12 : vector<16x256xf32>
    %14 = arith.addf %8, %13 : vector<16x256xf32>
    %c0_7 = arith.constant 0 : index
    %c2 = arith.constant 2 : index
    %15 = vector.load %arg3[%c0_7, %c2] : memref<16x9xf32, #tpu.memory_space<vmem>>, vector<16x1xf32>
    %16 = vector.extract_strided_slice %3 {offsets = [0, 2], sizes = [1, 256], strides = [1, 1]} : vector<1x384xf32> to vector<1x256xf32>
    %17 = vector.broadcast %15 : vector<16x1xf32> to vector<16x256xf32>
    %18 = vector.broadcast %16 : vector<1x256xf32> to vector<16x256xf32>
    %19 = arith.mulf %17, %18 : vector<16x256xf32>
    %20 = arith.addf %14, %19 : vector<16x256xf32>
    %c0_8 = arith.constant 0 : index
    %c3 = arith.constant 3 : index
    %21 = vector.load %arg3[%c0_8, %c3] : memref<16x9xf32, #tpu.memory_space<vmem>>, vector<16x1xf32>
    %22 = vector.extract_strided_slice %3 {offsets = [0, 16], sizes = [1, 256], strides = [1, 1]} : vector<1x384xf32> to vector<1x256xf32>
    %23 = vector.broadcast %21 : vector<16x1xf32> to vector<16x256xf32>
    %24 = vector.broadcast %22 : vector<1x256xf32> to vector<16x256xf32>
    %25 = arith.mulf %23, %24 : vector<16x256xf32>
    %26 = arith.addf %20, %25 : vector<16x256xf32>
    %c0_9 = arith.constant 0 : index
    %c4 = arith.constant 4 : index
    %27 = vector.load %arg3[%c0_9, %c4] : memref<16x9xf32, #tpu.memory_space<vmem>>, vector<16x1xf32>
    %28 = vector.extract_strided_slice %3 {offsets = [0, 17], sizes = [1, 256], strides = [1, 1]} : vector<1x384xf32> to vector<1x256xf32>
    %29 = vector.broadcast %27 : vector<16x1xf32> to vector<16x256xf32>
    %30 = vector.broadcast %28 : vector<1x256xf32> to vector<16x256xf32>
    %31 = arith.mulf %29, %30 : vector<16x256xf32>
    %32 = arith.addf %26, %31 : vector<16x256xf32>
    %c0_10 = arith.constant 0 : index
    %c5 = arith.constant 5 : index
    %33 = vector.load %arg3[%c0_10, %c5] : memref<16x9xf32, #tpu.memory_space<vmem>>, vector<16x1xf32>
    %34 = vector.extract_strided_slice %3 {offsets = [0, 18], sizes = [1, 256], strides = [1, 1]} : vector<1x384xf32> to vector<1x256xf32>
    %35 = vector.broadcast %33 : vector<16x1xf32> to vector<16x256xf32>
    %36 = vector.broadcast %34 : vector<1x256xf32> to vector<16x256xf32>
    %37 = arith.mulf %35, %36 : vector<16x256xf32>
    %38 = arith.addf %32, %37 : vector<16x256xf32>
    %c0_11 = arith.constant 0 : index
    %c6 = arith.constant 6 : index
    %39 = vector.load %arg3[%c0_11, %c6] : memref<16x9xf32, #tpu.memory_space<vmem>>, vector<16x1xf32>
    %40 = vector.extract_strided_slice %3 {offsets = [0, 32], sizes = [1, 256], strides = [1, 1]} : vector<1x384xf32> to vector<1x256xf32>
    %41 = vector.broadcast %39 : vector<16x1xf32> to vector<16x256xf32>
    %42 = vector.broadcast %40 : vector<1x256xf32> to vector<16x256xf32>
    %43 = arith.mulf %41, %42 : vector<16x256xf32>
    %44 = arith.addf %38, %43 : vector<16x256xf32>
    %c0_12 = arith.constant 0 : index
    %c7 = arith.constant 7 : index
    %45 = vector.load %arg3[%c0_12, %c7] : memref<16x9xf32, #tpu.memory_space<vmem>>, vector<16x1xf32>
    %46 = vector.extract_strided_slice %3 {offsets = [0, 33], sizes = [1, 256], strides = [1, 1]} : vector<1x384xf32> to vector<1x256xf32>
    %47 = vector.broadcast %45 : vector<16x1xf32> to vector<16x256xf32>
    %48 = vector.broadcast %46 : vector<1x256xf32> to vector<16x256xf32>
    %49 = arith.mulf %47, %48 : vector<16x256xf32>
    %50 = arith.addf %44, %49 : vector<16x256xf32>
    %c0_13 = arith.constant 0 : index
    %c8 = arith.constant 8 : index
    %51 = vector.load %arg3[%c0_13, %c8] : memref<16x9xf32, #tpu.memory_space<vmem>>, vector<16x1xf32>
    %52 = vector.extract_strided_slice %3 {offsets = [0, 34], sizes = [1, 256], strides = [1, 1]} : vector<1x384xf32> to vector<1x256xf32>
    %53 = vector.broadcast %51 : vector<16x1xf32> to vector<16x256xf32>
    %54 = vector.broadcast %52 : vector<1x256xf32> to vector<16x256xf32>
    %55 = arith.mulf %53, %54 : vector<16x256xf32>
    %56 = arith.addf %50, %55 : vector<16x256xf32>
    %c0_14 = arith.constant 0 : index
    %c0_15 = arith.constant 0 : index
    %57 = vector.load %arg4[%c0_14, %c0_15] : memref<16x1xf32, #tpu.memory_space<vmem>>, vector<16x1xf32>
    %58 = vector.broadcast %57 : vector<16x1xf32> to vector<16x256xf32>
    %59 = arith.addf %56, %58 : vector<16x256xf32>
    %cst = arith.constant 0.000000e+00 : f32
    %60 = vector.broadcast %cst : f32 to vector<16x256xf32>
    %61 = arith.cmpf oge, %59, %60 : vector<16x256xf32>
    %62 = vector.broadcast %0 : f32 to vector<16x256xf32>
    %63 = arith.mulf %62, %59 : vector<16x256xf32>
    %64 = arith.select %61, %59, %63 : vector<16x256xi1>, vector<16x256xf32>
    %c0_16 = arith.constant 0 : index
    %c0_17 = arith.constant 0 : index
    %65 = vector.load %arg5[%c0_16, %c0_17] : memref<16x16xf32, #tpu.memory_space<vmem>>, vector<16x16xf32>
    %cst_18 = arith.constant dense<0.000000e+00> : vector<16x256xf32>
    %66 = tpu.matmul %65, %64, %cst_18 {dimension_numbers = #tpu.dot_dimension_numbers<[1], [0], [0], [1], [0, 0, 1, 1], [], []>} : vector<16x16xf32>, vector<16x256xf32>, vector<16x256xf32> -> vector<16x256xf32>
    %c0_19 = arith.constant 0 : index
    %c0_20 = arith.constant 0 : index
    %67 = vector.load %arg6[%c0_19, %c0_20] : memref<16x1xf32, #tpu.memory_space<vmem>>, vector<16x1xf32>
    %68 = vector.broadcast %67 : vector<16x1xf32> to vector<16x256xf32>
    %69 = arith.addf %66, %68 : vector<16x256xf32>
    %cst_21 = arith.constant 0.000000e+00 : f32
    %70 = vector.broadcast %cst_21 : f32 to vector<16x256xf32>
    %71 = arith.cmpf oge, %69, %70 : vector<16x256xf32>
    %72 = vector.broadcast %0 : f32 to vector<16x256xf32>
    %73 = arith.mulf %72, %69 : vector<16x256xf32>
    %74 = arith.select %71, %69, %73 : vector<16x256xi1>, vector<16x256xf32>
    %c0_22 = arith.constant 0 : index
    %c0_23 = arith.constant 0 : index
    %75 = vector.load %arg7[%c0_22, %c0_23] : memref<1x16xf32, #tpu.memory_space<vmem>>, vector<1x16xf32>
    %cst_24 = arith.constant dense<0.000000e+00> : vector<1x256xf32>
    %76 = tpu.matmul %75, %74, %cst_24 {dimension_numbers = #tpu.dot_dimension_numbers<[1], [0], [0], [1], [0, 0, 1, 1], [], []>} : vector<1x16xf32>, vector<16x256xf32>, vector<1x256xf32> -> vector<1x256xf32>
    %77 = vector.broadcast %1 : f32 to vector<1x256xf32>
    %78 = arith.addf %76, %77 : vector<1x256xf32>
    %cst_25 = arith.constant 0.000000e+00 : f32
    %79 = vector.broadcast %cst_25 : f32 to vector<1x256xf32>
    %80 = arith.cmpf oge, %78, %79 : vector<1x256xf32>
    %81 = vector.broadcast %0 : f32 to vector<1x256xf32>
    %82 = arith.mulf %81, %78 : vector<1x256xf32>
    %83 = arith.select %80, %78, %82 : vector<1x256xi1>, vector<1x256xf32>
    %c0_26 = arith.constant 0 : index
    %c0_27 = arith.constant 0 : index
    %c0_28 = arith.constant 0 : index
    %84 = vector.load %arg8[%c0_26, %c0_27, %c0_28] : memref<1x1x256xf32, #tpu.memory_space<vmem>>, vector<1x1x256xf32>
    %85 = vector.shape_cast %84 : vector<1x1x256xf32> to vector<1x256xf32>
    %86 = vector.shape_cast %83 : vector<1x256xf32> to vector<1x1x256xf32>
    tpu.vector_store %arg8[%c0_26, %c0_27, %c0_28], %86 {strides = array<i32>} : memref<1x1x256xf32, #tpu.memory_space<vmem>>, vector<1x1x256xf32>,
    return
  }
  func.func @transform_0(%arg0: i32) -> i32 {
    %c0_i32 = arith.constant 0 : i32
    %c0_i32_0 = arith.constant 0 : i32
    return %c0_i32 : i32
  }
  func.func @transform_1(%arg0: i32) -> (i32, i32, i32) {
    %c0_i32 = arith.constant 0 : i32
    %c0_i32_0 = arith.constant 0 : i32
    %c0_i32_1 = arith.constant 0 : i32
    return %arg0, %c0_i32, %c0_i32_0 : i32, i32, i32
  }
  func.func @transform_2(%arg0: i32) -> (i32, i32) {
    %c0_i32 = arith.constant 0 : i32
    %c0_i32_0 = arith.constant 0 : i32
    %c0_i32_1 = arith.constant 0 : i32
    return %c0_i32, %c0_i32_0 : i32, i32
  }
  func.func @transform_3(%arg0: i32) -> (i32, i32) {
    %c0_i32 = arith.constant 0 : i32
    %c0_i32_0 = arith.constant 0 : i32
    %c0_i32_1 = arith.constant 0 : i32
    return %c0_i32, %c0_i32_0 : i32, i32
  }
  func.func @transform_4(%arg0: i32) -> (i32, i32) {
    %c0_i32 = arith.constant 0 : i32
    %c0_i32_0 = arith.constant 0 : i32
    %c0_i32_1 = arith.constant 0 : i32
    return %c0_i32, %c0_i32_0 : i32, i32
  }
  func.func @transform_5(%arg0: i32) -> (i32, i32) {
    %c0_i32 = arith.constant 0 : i32
    %c0_i32_0 = arith.constant 0 : i32
    %c0_i32_1 = arith.constant 0 : i32
    return %c0_i32, %c0_i32_0 : i32, i32
  }
  func.func @transform_6(%arg0: i32) -> (i32, i32) {
    %c0_i32 = arith.constant 0 : i32
    %c0_i32_0 = arith.constant 0 : i32
    %c0_i32_1 = arith.constant 0 : i32
    return %c0_i32, %c0_i32_0 : i32, i32
  }
  func.func @transform_7(%arg0: i32) -> (i32, i32, i32) {
    %c0_i32 = arith.constant 0 : i32
    %c0_i32_0 = arith.constant 0 : i32
    %c0_i32_1 = arith.constant 0 : i32
    return %arg0, %c0_i32, %c0_i32_0 : i32, i32, i32
  }
}

</mosaic_0001>

<llo_original>
// kernel: squeeze.1
$region0: #{squeeze.1}
  %s0 = inlined_call_operand.vmem [shape: f32[2,224], index: 0, kind: input, shape index: {}]
  %s1 = inlined_call_operand.vmem [shape: f32[2,14,16], index: 1, kind: output, shape index: {}]
  $region1: #{squeeze.1} parent=0
    #allocation0 [shape = 'u8[8192]{0}', space=vmem, size = 0x2000, scoped, tag = 'scoped mem for input reshape']
    %s3 = sshll.u32 1, 2
    %s4 = ssub.s32 %s3, 1
    %s5 = scalar_lea.vmem %s0, 2
    %v6 = vld [vmem:[%s5] sm:%s4]
    %s7 = scalar_lea.vmem [#allocation0], 8
    %8 = vst [vmem:[%s7] sm:%s4] %v6
    %v9 = vld [vmem:[%s0] sm:%s4]
    %10 = vst [vmem:[#allocation0] sm:%s4] %v9
    %v11 = vld [vmem:[#allocation0] sm:$0x3]
    %vm12 = vcmask 130048
    %13 = vst.msk [vmem:[%s1] ss:$16 sm:$0x3] %vm12, %v11
    %s14 = scalar_lea.vmem [#allocation0], 8
    %v15 = vld [vmem:[%s14] sm:$0x3]
    %vm16 = vcmask 130048
    %s17 = scalar_lea.vmem %s1, 8
    %18 = vst.msk [vmem:[%s17] ss:$16 sm:$0x3] %vm16, %v15
    %v19 = vld.sshfl [vmem:[#allocation0] sm:$0xff pattern:$0x99999180]
    %20 = vrot.lane.b32.xlu0 %v19, 112
    %v21 = vpop.permute.xlu0 %20
    %vm22 = vcmask 130048
    %s23 = scalar_lea.vmem %s1, 1
    %24 = vst.msk [vmem:[%s23] ss:$8 sm:$0xf] %vm22, %v21
    %v25 = vld.sshfl [vmem:[#allocation0] sm:$0xff pattern:$0x99999180]
    %26 = vrot.lane.b32.xlu0 %v25, 96
    %v27 = vpop.permute.xlu0 %26
    %vm28 = vcmask 130048
    %s29 = scalar_lea.vmem %s1, 2
    %30 = vst.msk [vmem:[%s29] ss:$8 sm:$0xf] %vm28, %v27
    %v31 = vld.sshfl [vmem:[#allocation0] sm:$0xff pattern:$0x99999180]
    %32 = vrot.lane.b32.xlu0 %v31, 80
    %v33 = vpop.permute.xlu0 %32
    %vm34 = vcmask 130048
    %s35 = scalar_lea.vmem %s1, 3
    %36 = vst.msk [vmem:[%s35] ss:$8 sm:$0xf] %vm34, %v33
    %v37 = vld.sshfl [vmem:[#allocation0] sm:$0xff pattern:$0x99999180]
    %38 = vrot.lane.b32.xlu0 %v37, 64
    %v39 = vpop.permute.xlu0 %38
    %vm40 = vcmask 130048
    %s41 = scalar_lea.vmem %s1, 4
    %42 = vst.msk [vmem:[%s41] ss:$8 sm:$0xf] %vm40, %v39
    %v43 = vld.sshfl [vmem:[#allocation0] sm:$0xff pattern:$0x99999180]
    %44 = vrot.lane.b32.xlu0 %v43, 48
    %v45 = vpop.permute.xlu0 %44
    %vm46 = vcmask 130048
    %s47 = scalar_lea.vmem %s1, 5
    %48 = vst.msk [vmem:[%s47] ss:$8 sm:$0xf] %vm46, %v45
    %v49 = vld [vmem:[#allocation0] sm:$0x3]
    %50 = vrot.lane.b32.xlu0 %v49, 32
    %v51 = vpop.permute.xlu0 %50
    %vm52 = vcmask 130048
    %s53 = scalar_lea.vmem %s1, 6
    %54 = vst.msk [vmem:[%s53] ss:$16 sm:$0x3] %vm52, %v51
    %v55 = vld [vmem:[#allocation0] sm:$0x3]
    %56 = vrot.lane.b32.xlu0 %v55, 16
    %v57 = vpop.permute.xlu0 %56
    %vm58 = vcmask 130048
    %s59 = scalar_lea.vmem %s1, 7
    %60 = vst.msk [vmem:[%s59] ss:$16 sm:$0x3] %vm58, %v57

// kernel: pattern_matcher_forward.1
$region0: #{pattern_matcher_forward.1}
  #allocation0 [shape = 'u32[]', space=smem, size = 0x4, offset = 0x4, fixed_abs, tag = 'smem constant byte address 0x4 - core index']
  #allocation1 [shape = 'u32[144,128]{1,0:T(1,128)}', space=vmem, size = 0x12000, scoped, tag = 'internal scratch']
  %s0 = inlined_call_operand.vmem [shape: f32[2], index: 0, kind: input, shape index: {}]
  %s1 = inlined_call_operand.vmem [shape: f32[2,1,384], index: 1, kind: input, shape index: {}]
  %s2 = inlined_call_operand.vmem [shape: f32[16,9], index: 2, kind: input, shape index: {}]
  %s3 = inlined_call_operand.vmem [shape: f32[16,1], index: 3, kind: input, shape index: {}]
  %s4 = inlined_call_operand.vmem [shape: f32[16,16], index: 4, kind: input, shape index: {}]
  %s5 = inlined_call_operand.vmem [shape: f32[16,1], index: 5, kind: input, shape index: {}]
  %s6 = inlined_call_operand.vmem [shape: f32[1,16], index: 6, kind: input, shape index: {}]
  %s7 = inlined_call_operand.vmem [shape: f32[2,1,256], index: 7, kind: output, shape index: {}]
  %s8 = sld [smem:[#allocation0]]
  $region65: #{pattern_matcher_forward.1} parent=0
    _
  %s10 = ssub.s32 1, %s8
  %s11 = scalar_select 0, %s10, %s8
  $region1: #{pattern_matcher_forward.1} parent=0
    #allocation2 [shape = 'u8[512]{0}', space=smem, size = 0x200, scoped, tag = 'input window, operand 0, single buffered']
    #allocation3 [shape = 's32[2]{0}', space=sflag, size = 0x8, scoped, tag = 'scoped memory for pattern_matcher_forward.1']
    %12 = vsyncpa [#allocation3], 0
    loop: start=0, step=1, limit=4
    $region2: #{pattern_matcher_forward.1} parent=1 // loop_pre_header
      _
    $region3: #{pattern_matcher_forward.1} parent=1 // loop_header
      %s14 = sphi 0, %s18
      %p15 = scmp.ge.s32.totalorder %s14, 4
      %s22 = sphi 0, %s22
      %s24 = sphi 0, %s22
      %s25 = sphi 0, %s24
      %s39 = sphi 0, %s25
      %s45 = sphi 0, %s47
      %s48 = sphi 0, %s45
      %s49 = sphi 0, %s48
      %s65 = sphi 0, %s49
      %s69 = sphi 0, %s69
      %s71 = sphi 0, %s69
      %s72 = sphi 0, %s71
      %s86 = sphi 0, %s72
      %s90 = sphi 0, %s90
      %s92 = sphi 0, %s90
      %s93 = sphi 0, %s92
      %s107 = sphi 0, %s93
      %s111 = sphi 0, %s111
      %s113 = sphi 0, %s111
      %s114 = sphi 0, %s113
      %s128 = sphi 0, %s114
      %s132 = sphi 0, %s132
      %s134 = sphi 0, %s132
      %s135 = sphi 0, %s134
      %s149 = sphi 0, %s135
      %s153 = sphi 0, %s153
      %s155 = sphi 0, %s153
      %s156 = sphi 0, %s155
      %s170 = sphi 0, %s156
      %s176 = sphi 0, %s178
      %s179 = sphi 0, %s176
      %s180 = sphi 0, %s179
      %s196 = sphi 0, %s180
    $region4: #{pattern_matcher_forward.1} parent=1 // loop_header_branch
      %17 = sbr.rel (%p15) target = $region8
    $region5: #{pattern_matcher_forward.1} parent=1 // loop_body
      %s19 = ssub.s32 %s14, 1
      %s20 = ssub.s32 %s14, 2
      %s21 = sadd.s32 %s14, 1
      %s23 = sadd.s32 %s22, 1
      %p26 = scmp.eq.s32.totalorder %s14, 1
      %p27 = scmp.ne.s32.totalorder %s22, %s24
      %p28 = scmp.eq.s32.totalorder %s14, 0
      %p29 = por %p27, %p28
      %p30 = scmp.ne.s32.totalorder %s22, %s24
      %p31 = scmp.eq.s32.totalorder %s19, 1
      %p32 = por %p30, %p31
      %p33 = scmp.ne.s32.totalorder %s24, %s25
      %p34 = scmp.eq.s32.totalorder %s19, 0
      %p35 = por %p33, %p34
      %p36 = scmp.ne.s32.totalorder %s24, %s25
      %p37 = scmp.eq.s32.totalorder %s20, 1
      %p38 = por %p36, %p37
      %p40 = scmp.ne.s32.totalorder %s25, %s39
      %p41 = scmp.eq.s32.totalorder %s20, 0
      %p42 = por %p40, %p41
      %s43 = ssub.s32 %s14, %s21
      %p44 = scmp.eq.s32.totalorder %s43, 0
      %s46 = sadd.s32 %s45, 1
      %s47 = scalar_select %p44, %s45, %s46
      %p50 = pneg %p44
      %p51 = scmp.eq.s32.totalorder %s14, 1
      %p52 = por %p50, %p51
      %p53 = scmp.ne.s32.totalorder %s45, %s48
      %p54 = scmp.eq.s32.totalorder %s14, 0
      %p55 = por %p53, %p54
      %p56 = scmp.ne.s32.totalorder %s45, %s48
      %p57 = scmp.eq.s32.totalorder %s19, 1
      %p58 = por %p56, %p57
      %p59 = scmp.ne.s32.totalorder %s48, %s49
      %p60 = scmp.eq.s32.totalorder %s19, 0
      %p61 = por %p59, %p60
      %p62 = scmp.ne.s32.totalorder %s48, %s49
      %p63 = scmp.eq.s32.totalorder %s20, 1
      %p64 = por %p62, %p63
      %p66 = scmp.ne.s32.totalorder %s49, %s65
      %p67 = scmp.eq.s32.totalorder %s20, 0
      %p68 = por %p66, %p67
      %s70 = sadd.s32 %s69, 1
      %p73 = scmp.eq.s32.totalorder %s14, 1
      %p74 = scmp.ne.s32.totalorder %s69, %s71
      %p75 = scmp.eq.s32.totalorder %s14, 0
      %p76 = por %p74, %p75
      %p77 = scmp.ne.s32.totalorder %s69, %s71
      %p78 = scmp.eq.s32.totalorder %s19, 1
      %p79 = por %p77, %p78
      %p80 = scmp.ne.s32.totalorder %s71, %s72
      %p81 = scmp.eq.s32.totalorder %s19, 0
      %p82 = por %p80, %p81
      %p83 = scmp.ne.s32.totalorder %s71, %s72
      %p84 = scmp.eq.s32.totalorder %s20, 1
      %p85 = por %p83, %p84
      %p87 = scmp.ne.s32.totalorder %s72, %s86
      %p88 = scmp.eq.s32.totalorder %s20, 0
      %p89 = por %p87, %p88
      %s91 = sadd.s32 %s90, 1
      %p94 = scmp.eq.s32.totalorder %s14, 1
      %p95 = scmp.ne.s32.totalorder %s90, %s92
      %p96 = scmp.eq.s32.totalorder %s14, 0
      %p97 = por %p95, %p96
      %p98 = scmp.ne.s32.totalorder %s90, %s92
      %p99 = scmp.eq.s32.totalorder %s19, 1
      %p100 = por %p98, %p99
      %p101 = scmp.ne.s32.totalorder %s92, %s93
      %p102 = scmp.eq.s32.totalorder %s19, 0
      %p103 = por %p101, %p102
      %p104 = scmp.ne.s32.totalorder %s92, %s93
      %p105 = scmp.eq.s32.totalorder %s20, 1
      %p106 = por %p104, %p105
      %p108 = scmp.ne.s32.totalorder %s93, %s107
      %p109 = scmp.eq.s32.totalorder %s20, 0
      %p110 = por %p108, %p109
      %s112 = sadd.s32 %s111, 1
      %p115 = scmp.eq.s32.totalorder %s14, 1
      %p116 = scmp.ne.s32.totalorder %s111, %s113
      %p117 = scmp.eq.s32.totalorder %s14, 0
      %p118 = por %p116, %p117
      %p119 = scmp.ne.s32.totalorder %s111, %s113
      %p120 = scmp.eq.s32.totalorder %s19, 1
      %p121 = por %p119, %p120
      %p122 = scmp.ne.s32.totalorder %s113, %s114
      %p123 = scmp.eq.s32.totalorder %s19, 0
      %p124 = por %p122, %p123
      %p125 = scmp.ne.s32.totalorder %s113, %s114
      %p126 = scmp.eq.s32.totalorder %s20, 1
      %p127 = por %p125, %p126
      %p129 = scmp.ne.s32.totalorder %s114, %s128
      %p130 = scmp.eq.s32.totalorder %s20, 0
      %p131 = por %p129, %p130
      %s133 = sadd.s32 %s132, 1
      %p136 = scmp.eq.s32.totalorder %s14, 1
      %p137 = scmp.ne.s32.totalorder %s132, %s134
      %p138 = scmp.eq.s32.totalorder %s14, 0
      %p139 = por %p137, %p138
      %p140 = scmp.ne.s32.totalorder %s132, %s134
      %p141 = scmp.eq.s32.totalorder %s19, 1
      %p142 = por %p140, %p141
      %p143 = scmp.ne.s32.totalorder %s134, %s135
      %p144 = scmp.eq.s32.totalorder %s19, 0
      %p145 = por %p143, %p144
      %p146 = scmp.ne.s32.totalorder %s134, %s135
      %p147 = scmp.eq.s32.totalorder %s20, 1
      %p148 = por %p146, %p147
      %p150 = scmp.ne.s32.totalorder %s135, %s149
      %p151 = scmp.eq.s32.totalorder %s20, 0
      %p152 = por %p150, %p151
      %s154 = sadd.s32 %s153, 1
      %p157 = scmp.eq.s32.totalorder %s14, 1
      %p158 = scmp.ne.s32.totalorder %s153, %s155
      %p159 = scmp.eq.s32.totalorder %s14, 0
      %p160 = por %p158, %p159
      %p161 = scmp.ne.s32.totalorder %s153, %s155
      %p162 = scmp.eq.s32.totalorder %s19, 1
      %p163 = por %p161, %p162
      %p164 = scmp.ne.s32.totalorder %s155, %s156
      %p165 = scmp.eq.s32.totalorder %s19, 0
      %p166 = por %p164, %p165
      %p167 = scmp.ne.s32.totalorder %s155, %s156
      %p168 = scmp.eq.s32.totalorder %s20, 1
      %p169 = por %p167, %p168
      %p171 = scmp.ne.s32.totalorder %s156, %s170
      %p172 = scmp.eq.s32.totalorder %s20, 0
      %p173 = por %p171, %p172
      %s174 = ssub.s32 %s14, %s21
      %p175 = scmp.eq.s32.totalorder %s174, 0
      %s177 = sadd.s32 %s176, 1
      %s178 = scalar_select %p175, %s176, %s177
      %p181 = pneg %p175
      %p182 = scmp.eq.s32.totalorder %s14, 1
      %p183 = por %p181, %p182
      %p184 = scmp.ne.s32.totalorder %s176, %s179
      %p185 = scmp.eq.s32.totalorder %s14, 0
      %p186 = por %p184, %p185
      %p187 = scmp.ne.s32.totalorder %s176, %s179
      %p188 = scmp.eq.s32.totalorder %s19, 1
      %p189 = por %p187, %p188
      %p190 = scmp.ne.s32.totalorder %s179, %s180
      %p191 = scmp.eq.s32.totalorder %s19, 0
      %p192 = por %p190, %p191
      %p193 = scmp.ne.s32.totalorder %s179, %s180
      %p194 = scmp.eq.s32.totalorder %s20, 1
      %p195 = por %p193, %p194
      %p197 = scmp.ne.s32.totalorder %s180, %s196
      %p198 = scmp.eq.s32.totalorder %s20, 0
      %p199 = por %p197, %p198
      %p200 = scmp.le.s32.totalorder 1, %s14
      %p201 = scmp.lt.s32.totalorder %s14, 3
      %p202 = pnand %p200, %p201
      %p203 = pneg %p202
      // Predicated region
      $region9: #{pattern_matcher_forward.1} parent=5 // pred_check
        _
      $region10: #{pattern_matcher_forward.1} parent=5 // pred_check_branch
        %205 = sbr.rel (%p202) target = $region12
      $region11: #{pattern_matcher_forward.1} parent=5 // pred_region
        %s206 = ssub.s32 %s14, 1
        // Predicated region
        $region13: #{pattern_matcher_forward.1} parent=11 // pred_check
          %p207 = pneg %p35
        $region14: #{pattern_matcher_forward.1} parent=11 // pred_check_branch
          %209 = sbr.rel (%p207) target = $region16
        $region15: #{pattern_matcher_forward.1} parent=11 // pred_region
          %s211 = ssub.s32 16, 16
          %212 = vsyncadd [#allocation3], %s211
          %s214 = sshll.u32 %s0, 4
          %s215 = int_to_ptr.vmem [resolvable:$true] %s214
          %217 = dma.vmem_to_smem %s215, 16, [#allocation2], [#allocation3]
        $region16: #{pattern_matcher_forward.1} parent=11 // pred_fallthru
          _
        // Predicated region
        $region17: #{pattern_matcher_forward.1} parent=11 // pred_check
          %p218 = pneg %p82
        $region18: #{pattern_matcher_forward.1} parent=11 // pred_check_branch
          %220 = sbr.rel (%p218) target = $region20
        $region19: #{pattern_matcher_forward.1} parent=11 // pred_region
          _
        $region20: #{pattern_matcher_forward.1} parent=11 // pred_fallthru
          _
        // Predicated region
        $region21: #{pattern_matcher_forward.1} parent=11 // pred_check
          %p221 = pneg %p103
        $region22: #{pattern_matcher_forward.1} parent=11 // pred_check_branch
          %223 = sbr.rel (%p221) target = $region24
        $region23: #{pattern_matcher_forward.1} parent=11 // pred_region
          _
        $region24: #{pattern_matcher_forward.1} parent=11 // pred_fallthru
          _
        // Predicated region
        $region25: #{pattern_matcher_forward.1} parent=11 // pred_check
          %p224 = pneg %p124
        $region26: #{pattern_matcher_forward.1} parent=11 // pred_check_branch
          %226 = sbr.rel (%p224) target = $region28
        $region27: #{pattern_matcher_forward.1} parent=11 // pred_region
          _
        $region28: #{pattern_matcher_forward.1} parent=11 // pred_fallthru
          _
        // Predicated region
        $region29: #{pattern_matcher_forward.1} parent=11 // pred_check
          %p227 = pneg %p145
        $region30: #{pattern_matcher_forward.1} parent=11 // pred_check_branch
          %229 = sbr.rel (%p227) target = $region32
        $region31: #{pattern_matcher_forward.1} parent=11 // pred_region
          _
        $region32: #{pattern_matcher_forward.1} parent=11 // pred_fallthru
          _
        // Predicated region
        $region33: #{pattern_matcher_forward.1} parent=11 // pred_check
          %p230 = pneg %p166
        $region34: #{pattern_matcher_forward.1} parent=11 // pred_check_branch
          %232 = sbr.rel (%p230) target = $region36
        $region35: #{pattern_matcher_forward.1} parent=11 // pred_region
          _
        $region36: #{pattern_matcher_forward.1} parent=11 // pred_fallthru
          _
      $region12: #{pattern_matcher_forward.1} parent=5 // pred_fallthru
        _
      %p233 = scmp.lt.s32.totalorder %s14, 2
      // Predicated region
      $region37: #{pattern_matcher_forward.1} parent=5 // pred_check
        %p234 = pneg %p233
      $region38: #{pattern_matcher_forward.1} parent=5 // pred_check_branch
        %236 = sbr.rel (%p234) target = $region40
      $region39: #{pattern_matcher_forward.1} parent=5 // pred_region
        // Predicated region
        $region41: #{pattern_matcher_forward.1} parent=39 // pred_check
          %p237 = pneg %p55
        $region42: #{pattern_matcher_forward.1} parent=39 // pred_check_branch
          %239 = sbr.rel (%p237) target = $region44
        $region43: #{pattern_matcher_forward.1} parent=39 // pred_region
          %p240 = scmp.lt.s32.totalorder %s14, 1
          %s241 = scalar_select %p240, %s14, 1
          %s242 = smul.addr %s241, 3
          %s243 = scalar_lea.vmem %s1, %s242
        $region44: #{pattern_matcher_forward.1} parent=39 // pred_fallthru
          _
      $region40: #{pattern_matcher_forward.1} parent=5 // pred_fallthru
        _
      %p244 = scmp.le.s32.totalorder 1, %s14
      %p245 = scmp.lt.s32.totalorder %s14, 3
      %p246 = pnand %p244, %p245
      %p247 = pneg %p246
      // Predicated region
      $region45: #{pattern_matcher_forward.1} parent=5 // pred_check
        _
      $region46: #{pattern_matcher_forward.1} parent=5 // pred_check_branch
        %249 = sbr.rel (%p246) target = $region48
      $region47: #{pattern_matcher_forward.1} parent=5 // pred_region
        %s250 = ssub.s32 %s14, 1
        // Predicated region
        $region49: #{pattern_matcher_forward.1} parent=47 // pred_check
          %p251 = pneg %p35
        $region50: #{pattern_matcher_forward.1} parent=47 // pred_check_branch
          %253 = sbr.rel (%p251) target = $region52
        $region51: #{pattern_matcher_forward.1} parent=47 // pred_region
          %254 = dma.done [#allocation3], 16
        $region52: #{pattern_matcher_forward.1} parent=47 // pred_fallthru
          _
        %255 = sfence
        %p256 = pneg %p35
        %p257 = pneg %p32
        %p258 = scmp.lt.s32.totalorder %s19, 1
        %s259 = scalar_select %p258, %s19, 1
        %s260 = smul.addr %s259, 3
        %s261 = scalar_lea.vmem %s1, %s260
        %p262 = pneg %p61
        %p263 = pneg %p58
        %p264 = pneg %p82
        %p265 = pneg %p79
        %p266 = pneg %p103
        %p267 = pneg %p100
        %p268 = pneg %p124
        %p269 = pneg %p121
        %p270 = pneg %p145
        %p271 = pneg %p142
        %p272 = pneg %p166
        %p273 = pneg %p163
        %p274 = pneg %p192
        %p275 = pneg %p189
        %p276 = scmp.lt.s32.totalorder %s19, 1
        %s277 = scalar_select %p276, %s19, 1
        %s278 = smul.addr %s277, 2
        %s279 = scalar_lea.vmem %s7, %s278
        %p280 = scmp.lt.s32.totalorder %s19, 1
        %s281 = scalar_select %p280, %s19, 1
        %s282 = smul.addr %s281, 3
        %s283 = scalar_lea.vmem %s1, %s282
        %p284 = scmp.lt.s32.totalorder %s19, 1
        %s285 = scalar_select %p284, %s19, 1
        %s286 = smul.addr %s285, 2
        %s287 = scalar_lea.vmem %s7, %s286
        %s288 = sld [smem:[#allocation2]]
        %s289 = sld [smem:[#allocation2 + $0x1]]
        %v290 = vld [vmem:[%s283] sm:$0x7]
        %v291 = vld [vmem:[%s2] sm:$0xff]
        %v292 = vld [vmem:[%s2 + $0x8] sm:$0xff]
        %294 = vset.pattern.permute.xlu0 0
        %295 = vperm.xlu0 %294, %v291
        %v296 = vpop.permute.xlu0 %295
        %299 = vset.pattern.permute.xlu0 0
        %300 = vperm.xlu0 %299, %v292
        %v301 = vpop.permute.xlu0 %300
        %v304 = vlaneseq
        %v305 = vshrl.u32 %v304, 7
        %v306 = vsub.s32 0, %v305
        %v307 = vrot.slane %v290, %v306
        %v308 = vlaneseq
        %v309 = vshrl.u32 %v308, 7
        %v310 = vsub.s32 1, %v309
        %v311 = vrot.slane %v290, %v310
        %v314 = vmul.f32 %v296, %v307
        %v315 = vmul.f32 %v296, %v311
        %v316 = vmul.f32 %v301, %v307
        %v317 = vmul.f32 %v301, %v311
        %318 = vset.pattern.permute.xlu0 1
        %319 = vperm.xlu0 %318, %v291
        %v320 = vpop.permute.xlu0 %319
        %322 = vset.pattern.permute.xlu0 1
        %323 = vperm.xlu0 %322, %v292
        %v324 = vpop.permute.xlu0 %323
        %v326 = vlaneseq
        %v327 = vshrl.u32 %v326, 7
        %v328 = vsub.s32 2, %v327
        %v329 = vrot.slane %v290, %v328
        %v331 = vmul.f32 %v320, %v307
        %v332 = vmul.f32 %v320, %v311
        %v333 = vmul.f32 %v320, %v329
        %v334 = vmul.f32 %v324, %v307
        %v335 = vmul.f32 %v324, %v311
        %v336 = vmul.f32 %v324, %v329
        %343 = vrot.lane.b32.xlu0 %v331, 127
        %v344 = vpop.permute.xlu0 %343
        %345 = vrot.lane.b32.xlu0 %v332, 127
        %v346 = vpop.permute.xlu0 %345
        %347 = vrot.lane.b32.xlu0 %v333, 127
        %v348 = vpop.permute.xlu0 %347
        %349 = vrot.lane.b32.xlu0 %v334, 127
        %v350 = vpop.permute.xlu0 %349
        %351 = vrot.lane.b32.xlu0 %v335, 127
        %v352 = vpop.permute.xlu0 %351
        %353 = vrot.lane.b32.xlu0 %v336, 127
        %v354 = vpop.permute.xlu0 %353
        %vm355 = vcmask 1039360
        %v356 = vsel %vm355, %v344, %v346
        %v357 = vsel %vm355, %v346, %v348
        %v358 = vsel %vm355, %v350, %v352
        %v359 = vsel %vm355, %v352, %v354
        %v364 = vadd.f32 %v314, %v356
        %v365 = vadd.f32 %v315, %v357
        %v366 = vadd.f32 %v316, %v358
        %v367 = vadd.f32 %v317, %v359
        %368 = vset.pattern.permute.xlu0 2
        %369 = vperm.xlu0 %368, %v291
        %v370 = vpop.permute.xlu0 %369
        %372 = vset.pattern.permute.xlu0 2
        %373 = vperm.xlu0 %372, %v292
        %v374 = vpop.permute.xlu0 %373
        %v376 = vmul.f32 %v370, %v307
        %v377 = vmul.f32 %v370, %v311
        %v378 = vmul.f32 %v370, %v329
        %v379 = vmul.f32 %v374, %v307
        %v380 = vmul.f32 %v374, %v311
        %v381 = vmul.f32 %v374, %v329
        %388 = vrot.lane.b32.xlu0 %v376, 126
        %v389 = vpop.permute.xlu0 %388
        %390 = vrot.lane.b32.xlu0 %v377, 126
        %v391 = vpop.permute.xlu0 %390
        %392 = vrot.lane.b32.xlu0 %v378, 126
        %v393 = vpop.permute.xlu0 %392
        %394 = vrot.lane.b32.xlu0 %v379, 126
        %v395 = vpop.permute.xlu0 %394
        %396 = vrot.lane.b32.xlu0 %v380, 126
        %v397 = vpop.permute.xlu0 %396
        %398 = vrot.lane.b32.xlu0 %v381, 126
        %v399 = vpop.permute.xlu0 %398
        %vm400 = vcmask 1031168
        %v401 = vsel %vm400, %v389, %v391
        %v402 = vsel %vm400, %v391, %v393
        %v403 = vsel %vm400, %v395, %v397
        %v404 = vsel %vm400, %v397, %v399
        %v409 = vadd.f32 %v364, %v401
        %v410 = vadd.f32 %v365, %v402
        %v411 = vadd.f32 %v366, %v403
        %v412 = vadd.f32 %v367, %v404
        %413 = vset.pattern.permute.xlu0 3
        %414 = vperm.xlu0 %413, %v291
        %v415 = vpop.permute.xlu0 %414
        %417 = vset.pattern.permute.xlu0 3
        %418 = vperm.xlu0 %417, %v292
        %v419 = vpop.permute.xlu0 %418
        %v421 = vmul.f32 %v415, %v307
        %v422 = vmul.f32 %v415, %v311
        %v423 = vmul.f32 %v415, %v329
        %v424 = vmul.f32 %v419, %v307
        %v425 = vmul.f32 %v419, %v311
        %v426 = vmul.f32 %v419, %v329
        %433 = vrot.lane.b32.xlu0 %v421, 112
        %v434 = vpop.permute.xlu0 %433
        %435 = vrot.lane.b32.xlu0 %v422, 112
        %v436 = vpop.permute.xlu0 %435
        %437 = vrot.lane.b32.xlu0 %v423, 112
        %v438 = vpop.permute.xlu0 %437
        %439 = vrot.lane.b32.xlu0 %v424, 112
        %v440 = vpop.permute.xlu0 %439
        %441 = vrot.lane.b32.xlu0 %v425, 112
        %v442 = vpop.permute.xlu0 %441
        %443 = vrot.lane.b32.xlu0 %v426, 112
        %v444 = vpop.permute.xlu0 %443
        %vm445 = vcmask 916480
        %v446 = vsel %vm445, %v434, %v436
        %v447 = vsel %vm445, %v436, %v438
        %v448 = vsel %vm445, %v440, %v442
        %v449 = vsel %vm445, %v442, %v444
        %v454 = vadd.f32 %v409, %v446
        %v455 = vadd.f32 %v410, %v447
        %v456 = vadd.f32 %v411, %v448
        %v457 = vadd.f32 %v412, %v449
        %458 = vset.pattern.permute.xlu0 4
        %459 = vperm.xlu0 %458, %v291
        %v460 = vpop.permute.xlu0 %459
        %462 = vset.pattern.permute.xlu0 4
        %463 = vperm.xlu0 %462, %v292
        %v464 = vpop.permute.xlu0 %463
        %v466 = vmul.f32 %v460, %v307
        %v467 = vmul.f32 %v460, %v311
        %v468 = vmul.f32 %v460, %v329
        %v469 = vmul.f32 %v464, %v307
        %v470 = vmul.f32 %v464, %v311
        %v471 = vmul.f32 %v464, %v329
        %478 = vrot.lane.b32.xlu0 %v466, 111
        %v479 = vpop.permute.xlu0 %478
        %480 = vrot.lane.b32.xlu0 %v467, 111
        %v481 = vpop.permute.xlu0 %480
        %482 = vrot.lane.b32.xlu0 %v468, 111
        %v483 = vpop.permute.xlu0 %482
        %484 = vrot.lane.b32.xlu0 %v469, 111
        %v485 = vpop.permute.xlu0 %484
        %486 = vrot.lane.b32.xlu0 %v470, 111
        %v487 = vpop.permute.xlu0 %486
        %488 = vrot.lane.b32.xlu0 %v471, 111
        %v489 = vpop.permute.xlu0 %488
        %vm490 = vcmask 908288
        %v491 = vsel %vm490, %v479, %v481
        %v492 = vsel %vm490, %v481, %v483
        %v493 = vsel %vm490, %v485, %v487
        %v494 = vsel %vm490, %v487, %v489
        %v499 = vadd.f32 %v454, %v491
        %v500 = vadd.f32 %v455, %v492
        %v501 = vadd.f32 %v456, %v493
        %v502 = vadd.f32 %v457, %v494
        %503 = vset.pattern.permute.xlu0 5
        %504 = vperm.xlu0 %503, %v291
        %v505 = vpop.permute.xlu0 %504
        %507 = vset.pattern.permute.xlu0 5
        %508 = vperm.xlu0 %507, %v292
        %v509 = vpop.permute.xlu0 %508
        %v511 = vmul.f32 %v505, %v307
        %v512 = vmul.f32 %v505, %v311
        %v513 = vmul.f32 %v505, %v329
        %v514 = vmul.f32 %v509, %v307
        %v515 = vmul.f32 %v509, %v311
        %v516 = vmul.f32 %v509, %v329
        %523 = vrot.lane.b32.xlu0 %v511, 110
        %v524 = vpop.permute.xlu0 %523
        %525 = vrot.lane.b32.xlu0 %v512, 110
        %v526 = vpop.permute.xlu0 %525
        %527 = vrot.lane.b32.xlu0 %v513, 110
        %v528 = vpop.permute.xlu0 %527
        %529 = vrot.lane.b32.xlu0 %v514, 110
        %v530 = vpop.permute.xlu0 %529
        %531 = vrot.lane.b32.xlu0 %v515, 110
        %v532 = vpop.permute.xlu0 %531
        %533 = vrot.lane.b32.xlu0 %v516, 110
        %v534 = vpop.permute.xlu0 %533
        %vm535 = vcmask 900096
        %v536 = vsel %vm535, %v524, %v526
        %v537 = vsel %vm535, %v526, %v528
        %v538 = vsel %vm535, %v530, %v532
        %v539 = vsel %vm535, %v532, %v534
        %v544 = vadd.f32 %v499, %v536
        %v545 = vadd.f32 %v500, %v537
        %v546 = vadd.f32 %v501, %v538
        %v547 = vadd.f32 %v502, %v539
        %548 = vset.pattern.permute.xlu0 6
        %549 = vperm.xlu0 %548, %v291
        %v550 = vpop.permute.xlu0 %549
        %552 = vset.pattern.permute.xlu0 6
        %553 = vperm.xlu0 %552, %v292
        %v554 = vpop.permute.xlu0 %553
        %v556 = vmul.f32 %v550, %v307
        %v557 = vmul.f32 %v550, %v311
        %v558 = vmul.f32 %v550, %v329
        %v559 = vmul.f32 %v554, %v307
        %v560 = vmul.f32 %v554, %v311
        %v561 = vmul.f32 %v554, %v329
        %568 = vrot.lane.b32.xlu0 %v556, 96
        %v569 = vpop.permute.xlu0 %568
        %570 = vrot.lane.b32.xlu0 %v557, 96
        %v571 = vpop.permute.xlu0 %570
        %572 = vrot.lane.b32.xlu0 %v558, 96
        %v573 = vpop.permute.xlu0 %572
        %574 = vrot.lane.b32.xlu0 %v559, 96
        %v575 = vpop.permute.xlu0 %574
        %576 = vrot.lane.b32.xlu0 %v560, 96
        %v577 = vpop.permute.xlu0 %576
        %578 = vrot.lane.b32.xlu0 %v561, 96
        %v579 = vpop.permute.xlu0 %578
        %vm580 = vcmask 785408
        %v581 = vsel %vm580, %v569, %v571
        %v582 = vsel %vm580, %v571, %v573
        %v583 = vsel %vm580, %v575, %v577
        %v584 = vsel %vm580, %v577, %v579
        %v589 = vadd.f32 %v544, %v581
        %v590 = vadd.f32 %v545, %v582
        %v591 = vadd.f32 %v546, %v583
        %v592 = vadd.f32 %v547, %v584
        %593 = vset.pattern.permute.xlu0 7
        %594 = vperm.xlu0 %593, %v291
        %v595 = vpop.permute.xlu0 %594
        %597 = vset.pattern.permute.xlu0 7
        %598 = vperm.xlu0 %597, %v292
        %v599 = vpop.permute.xlu0 %598
        %v601 = vmul.f32 %v595, %v307
        %v602 = vmul.f32 %v595, %v311
        %v603 = vmul.f32 %v595, %v329
        %v604 = vmul.f32 %v599, %v307
        %v605 = vmul.f32 %v599, %v311
        %v606 = vmul.f32 %v599, %v329
        %613 = vrot.lane.b32.xlu0 %v601, 95
        %v614 = vpop.permute.xlu0 %613
        %615 = vrot.lane.b32.xlu0 %v602, 95
        %v616 = vpop.permute.xlu0 %615
        %617 = vrot.lane.b32.xlu0 %v603, 95
        %v618 = vpop.permute.xlu0 %617
        %619 = vrot.lane.b32.xlu0 %v604, 95
        %v620 = vpop.permute.xlu0 %619
        %621 = vrot.lane.b32.xlu0 %v605, 95
        %v622 = vpop.permute.xlu0 %621
        %623 = vrot.lane.b32.xlu0 %v606, 95
        %v624 = vpop.permute.xlu0 %623
        %vm625 = vcmask 777216
        %v626 = vsel %vm625, %v614, %v616
        %v627 = vsel %vm625, %v616, %v618
        %v628 = vsel %vm625, %v620, %v622
        %v629 = vsel %vm625, %v622, %v624
        %v634 = vadd.f32 %v589, %v626
        %v635 = vadd.f32 %v590, %v627
        %v636 = vadd.f32 %v591, %v628
        %v637 = vadd.f32 %v592, %v629
        %638 = vset.pattern.permute.xlu0 8
        %639 = vperm.xlu0 %638, %v291
        %v640 = vpop.permute.xlu0 %639
        %642 = vset.pattern.permute.xlu0 8
        %643 = vperm.xlu0 %642, %v292
        %v644 = vpop.permute.xlu0 %643
        %v646 = vmul.f32 %v640, %v307
        %v647 = vmul.f32 %v640, %v311
        %v648 = vmul.f32 %v640, %v329
        %v649 = vmul.f32 %v644, %v307
        %v650 = vmul.f32 %v644, %v311
        %v651 = vmul.f32 %v644, %v329
        %658 = vrot.lane.b32.xlu0 %v646, 94
        %v659 = vpop.permute.xlu0 %658
        %660 = vrot.lane.b32.xlu0 %v647, 94
        %v661 = vpop.permute.xlu0 %660
        %662 = vrot.lane.b32.xlu0 %v648, 94
        %v663 = vpop.permute.xlu0 %662
        %664 = vrot.lane.b32.xlu0 %v649, 94
        %v665 = vpop.permute.xlu0 %664
        %666 = vrot.lane.b32.xlu0 %v650, 94
        %v667 = vpop.permute.xlu0 %666
        %668 = vrot.lane.b32.xlu0 %v651, 94
        %v669 = vpop.permute.xlu0 %668
        %vm670 = vcmask 769024
        %v671 = vsel %vm670, %v659, %v661
        %v672 = vsel %vm670, %v661, %v663
        %v673 = vsel %vm670, %v665, %v667
        %v674 = vsel %vm670, %v667, %v669
        %v679 = vadd.f32 %v634, %v671
        %v680 = vadd.f32 %v635, %v672
        %v681 = vadd.f32 %v636, %v673
        %v682 = vadd.f32 %v637, %v674
        %v683 = vld [vmem:[%s3] sm:$0xff]
        %v684 = vld [vmem:[%s3 + $0x8] sm:$0xff]
        %686 = vset.pattern.permute.xlu0 0
        %687 = vperm.xlu0 %686, %v683
        %v688 = vpop.permute.xlu0 %687
        %691 = vset.pattern.permute.xlu0 0
        %692 = vperm.xlu0 %691, %v684
        %v693 = vpop.permute.xlu0 %692
        %v695 = vadd.f32 %v679, %v688
        %v696 = vadd.f32 %v680, %v688
        %v697 = vadd.f32 %v681, %v693
        %v698 = vadd.f32 %v682, %v693
        %vm699 = vcmp.ge.f32.partialorder %v695, 0.0
        %vm700 = vcmp.ge.f32.partialorder %v696, 0.0
        %vm701 = vcmp.ge.f32.partialorder %v697, 0.0
        %vm702 = vcmp.ge.f32.partialorder %v698, 0.0
        %v703 = vstv %s288
        %v704 = vmul.f32 %v703, %v695
        %v705 = vmul.f32 %v703, %v696
        %v706 = vmul.f32 %v703, %v697
        %v707 = vmul.f32 %v703, %v698
        %v708 = vsel %vm699, %v695, %v704
        %v709 = vsel %vm700, %v696, %v705
        %v710 = vsel %vm701, %v697, %v706
        %v711 = vsel %vm702, %v698, %v707
        %v712 = vld [vmem:[%s4] sm:$0xff]
        %v713 = vld [vmem:[%s4 + $0x8] sm:$0xff]
        %v714 = vld [vmem:[%s5] sm:$0xff]
        %v715 = vld [vmem:[%s5 + $0x8] sm:$0xff]
        %717 = vset.pattern.permute.xlu0 0
        %718 = vperm.xlu0 %717, %v714
        %v719 = vpop.permute.xlu0 %718
        %722 = vset.pattern.permute.xlu0 0
        %723 = vperm.xlu0 %722, %v715
        %v724 = vpop.permute.xlu0 %723
        %vm726 = vcmask 130048
        %v728 = vsel %vm726, %v712, 0
        %v731 = vsel %vm726, %v713, 0
        %733 = vmatprep.subr.mxu0 0.0
        %734 = vmatpush1.msra.mxu0 0.0
        %735 = vmatprep.subr.mxu0 0.0
        %736 = vmatpush1.msra.mxu0 0.0
        %737 = vmatprep.subr.mxu0 0.0
        %738 = vmatpush1.msra.mxu0 0.0
        %739 = vmatprep.subr.mxu0 0.0
        %740 = vmatpush1.msra.mxu0 0.0
        %741 = vmatprep.subr.mxu0 0.0
        %742 = vmatpush1.msra.mxu0 0.0
        %743 = vmatprep.subr.mxu0 0.0
        %744 = vmatpush1.msra.mxu0 0.0
        %745 = vmatprep.subr.mxu0 0.0
        %746 = vmatpush1.msra.mxu0 0.0
        %747 = vmatprep.subr.mxu0 0.0
        %748 = vmatpush1.msra.mxu0 0.0
        %749 = vmatprep.subr.mxu0 0.0
        %750 = vmatpush1.msra.mxu0 0.0
        %751 = vmatprep.subr.mxu0 0.0
        %752 = vmatpush1.msra.mxu0 0.0
        %753 = vmatprep.subr.mxu0 0.0
        %754 = vmatpush1.msra.mxu0 0.0
        %755 = vmatprep.subr.mxu0 0.0
        %756 = vmatpush1.msra.mxu0 0.0
        %757 = vmatprep.subr.mxu0 0.0
        %758 = vmatpush1.msra.mxu0 0.0
        %759 = vmatprep.subr.mxu0 0.0
        %760 = vmatpush1.msra.mxu0 0.0
        %761 = vmatprep.subr.mxu0 %v711
        %762 = vmatpush1.msra.mxu0 %v710
        %763 = vmatprep.subr.mxu0 %v709
        %764 = vmatpush1.msra.mxu0 %v708
        %765 = vmatprep.subr.mxu0 0.0
        %766 = vmatpush2.msra.mxu0 0.0
        %767 = vmatprep.subr.mxu0 0.0
        %768 = vmatpush2.msra.mxu0 0.0
        %769 = vmatprep.subr.mxu0 0.0
        %770 = vmatpush2.msra.mxu0 0.0
        %771 = vmatprep.subr.mxu0 0.0
        %772 = vmatpush2.msra.mxu0 0.0
        %773 = vmatprep.subr.mxu0 0.0
        %774 = vmatpush2.msra.mxu0 0.0
        %775 = vmatprep.subr.mxu0 0.0
        %776 = vmatpush2.msra.mxu0 0.0
        %777 = vmatprep.subr.mxu0 0.0
        %778 = vmatpush2.msra.mxu0 0.0
        %779 = vmatprep.subr.mxu0 0.0
        %780 = vmatpush2.msra.mxu0 0.0
        %781 = vmatprep.subr.mxu0 0.0
        %782 = vmatpush2.msra.mxu0 0.0
        %783 = vmatprep.subr.mxu0 0.0
        %784 = vmatpush2.msra.mxu0 0.0
        %785 = vmatprep.subr.mxu0 0.0
        %786 = vmatpush2.msra.mxu0 0.0
        %787 = vmatprep.subr.mxu0 0.0
        %788 = vmatpush2.msra.mxu0 0.0
        %789 = vmatprep.subr.mxu0 0.0
        %790 = vmatpush2.msra.mxu0 0.0
        %791 = vmatprep.subr.mxu0 0.0
        %792 = vmatpush2.msra.mxu0 0.0
        %793 = vmatprep.subr.mxu0 0.0
        %794 = vmatpush2.msra.mxu0 0.0
        %795 = vmatprep.subr.mxu0 0.0
        %796 = vmatpush2.msra.mxu0 0.0
        %797 = vmatprep.mubr.f32.mxu0 0.0
        %798 = vmatmul.mubr.f32.gmra.mxu0 %v728
        %v799 = vpop.f32.mrf.mxu0
        %v800 = vadd.f32 %v719, %v799
        %v801 = vpop.f32.mrf.mxu0
        %v802 = vadd.f32 %v719, %v801
        %803 = vmatprep.mubr.f32.mxu0 0.0
        %804 = vmatmul.mubr.f32.gmra.mxu0 %v731
        %v805 = vpop.f32.mrf.mxu0
        %v806 = vadd.f32 %v724, %v805
        %v807 = vpop.f32.mrf.mxu0
        %v808 = vadd.f32 %v724, %v807
        %809 = vdwg.mxu0
        %vm810 = vcmp.ge.f32.partialorder %v800, 0.0
        %vm811 = vcmp.ge.f32.partialorder %v802, 0.0
        %vm812 = vcmp.ge.f32.partialorder %v806, 0.0
        %vm813 = vcmp.ge.f32.partialorder %v808, 0.0
        %v814 = vmul.f32 %v703, %v800
        %v815 = vmul.f32 %v703, %v802
        %v816 = vmul.f32 %v703, %v806
        %v817 = vmul.f32 %v703, %v808
        %v818 = vsel %vm810, %v800, %v814
        %v819 = vsel %vm811, %v802, %v815
        %v820 = vsel %vm812, %v806, %v816
        %v821 = vsel %vm813, %v808, %v817
        %v822 = vld [vmem:[%s6] sm:$0x1]
        %v823 = vstv %s289
        %v825 = vsel %vm726, %v822, 0
        %827 = vmatprep.subr.mxu0 0.0
        %828 = vmatpush1.msra.mxu0 0.0
        %829 = vmatprep.subr.mxu0 0.0
        %830 = vmatpush1.msra.mxu0 0.0
        %831 = vmatprep.subr.mxu0 0.0
        %832 = vmatpush1.msra.mxu0 0.0
        %833 = vmatprep.subr.mxu0 0.0
        %834 = vmatpush1.msra.mxu0 0.0
        %835 = vmatprep.subr.mxu0 0.0
        %836 = vmatpush1.msra.mxu0 0.0
        %837 = vmatprep.subr.mxu0 0.0
        %838 = vmatpush1.msra.mxu0 0.0
        %839 = vmatprep.subr.mxu0 0.0
        %840 = vmatpush1.msra.mxu0 0.0
        %841 = vmatprep.subr.mxu0 0.0
        %842 = vmatpush1.msra.mxu0 0.0
        %843 = vmatprep.subr.mxu0 0.0
        %844 = vmatpush1.msra.mxu0 0.0
        %845 = vmatprep.subr.mxu0 0.0
        %846 = vmatpush1.msra.mxu0 0.0
        %847 = vmatprep.subr.mxu0 0.0
        %848 = vmatpush1.msra.mxu0 0.0
        %849 = vmatprep.subr.mxu0 0.0
        %850 = vmatpush1.msra.mxu0 0.0
        %851 = vmatprep.subr.mxu0 0.0
        %852 = vmatpush1.msra.mxu0 0.0
        %853 = vmatprep.subr.mxu0 0.0
        %854 = vmatpush1.msra.mxu0 0.0
        %855 = vmatprep.subr.mxu0 %v821
        %856 = vmatpush1.msra.mxu0 %v820
        %857 = vmatprep.subr.mxu0 %v819
        %858 = vmatpush1.msra.mxu0 %v818
        %859 = vmatprep.subr.mxu0 0.0
        %860 = vmatpush2.msra.mxu0 0.0
        %861 = vmatprep.subr.mxu0 0.0
        %862 = vmatpush2.msra.mxu0 0.0
        %863 = vmatprep.subr.mxu0 0.0
        %864 = vmatpush2.msra.mxu0 0.0
        %865 = vmatprep.subr.mxu0 0.0
        %866 = vmatpush2.msra.mxu0 0.0
        %867 = vmatprep.subr.mxu0 0.0
        %868 = vmatpush2.msra.mxu0 0.0
        %869 = vmatprep.subr.mxu0 0.0
        %870 = vmatpush2.msra.mxu0 0.0
        %871 = vmatprep.subr.mxu0 0.0
        %872 = vmatpush2.msra.mxu0 0.0
        %873 = vmatprep.subr.mxu0 0.0
        %874 = vmatpush2.msra.mxu0 0.0
        %875 = vmatprep.subr.mxu0 0.0
        %876 = vmatpush2.msra.mxu0 0.0
        %877 = vmatprep.subr.mxu0 0.0
        %878 = vmatpush2.msra.mxu0 0.0
        %879 = vmatprep.subr.mxu0 0.0
        %880 = vmatpush2.msra.mxu0 0.0
        %881 = vmatprep.subr.mxu0 0.0
        %882 = vmatpush2.msra.mxu0 0.0
        %883 = vmatprep.subr.mxu0 0.0
        %884 = vmatpush2.msra.mxu0 0.0
        %885 = vmatprep.subr.mxu0 0.0
        %886 = vmatpush2.msra.mxu0 0.0
        %887 = vmatprep.subr.mxu0 0.0
        %888 = vmatpush2.msra.mxu0 0.0
        %889 = vmatprep.subr.mxu0 0.0
        %890 = vmatpush2.msra.mxu0 0.0
        %891 = vmatprep.mubr.f32.mxu0 0.0
        %892 = vmatmul.mubr.f32.gmra.mxu0 %v825
        %v893 = vpop.f32.mrf.mxu0
        %v894 = vadd.f32 %v823, %v893
        %v895 = vpop.f32.mrf.mxu0
        %v896 = vadd.f32 %v823, %v895
        %897 = vdwg.mxu0
        %vm898 = vcmp.ge.f32.partialorder %v894, 0.0
        %vm899 = vcmp.ge.f32.partialorder %v896, 0.0
        %v900 = vmul.f32 %v703, %v894
        %v901 = vmul.f32 %v703, %v896
        %v902 = vsel %vm898, %v894, %v900
        %v903 = vsel %vm899, %v896, %v901
        %v906 = vcombine.low %v902, %v903
        %v908 = vunpack.c.l.s4 1966171168
        %v909 = vunpack.c.0.s8 %v908
        %v910 = vlaneseq
        %v911 = vshrl.u32 %v910, 7
        %v912 = vsub.s32 %v909, %v911
        %v913 = vrot.slane %v906, %v912
        %v915 = vunpack.c.l.s4 1966171168
        %v916 = vunpack.c.0.s8 %v915
        %v917 = vlaneseq
        %v918 = vshrl.u32 %v917, 7
        %v919 = vsub.s32 %v916, %v918
        %v920 = vrot.slane %v913, %v919
        %v922 = vlaneseq
        %vm923 = vcmp.ge.s32.totalorder %v922, 0
        %vm924 = vcmp.lt.s32.totalorder %v922, 256
        %vm925 = vmand %vm923, %vm924
        %926 = vst.msk [vmem:[%s287] sm:$0x3] %vm925, %v920
        %p927 = scmp.lt.s32.totalorder %s19, 1
        %s928 = scalar_select %p927, %s19, 1
        %s929 = smul.addr %s928, 2
        %s930 = scalar_lea.vmem %s7, %s929
        // Predicated region
        $region53: #{pattern_matcher_forward.1} parent=47 // pred_check
          %p931 = pneg %p189
        $region54: #{pattern_matcher_forward.1} parent=47 // pred_check_branch
          %933 = sbr.rel (%p931) target = $region56
        $region55: #{pattern_matcher_forward.1} parent=47 // pred_region
          _
        $region56: #{pattern_matcher_forward.1} parent=47 // pred_fallthru
          _
      $region48: #{pattern_matcher_forward.1} parent=5 // pred_fallthru
        _
      %p934 = scmp.le.s32.totalorder 2, %s14
      // Predicated region
      $region57: #{pattern_matcher_forward.1} parent=5 // pred_check
        %p935 = pneg %p934
      $region58: #{pattern_matcher_forward.1} parent=5 // pred_check_branch
        %937 = sbr.rel (%p935) target = $region60
      $region59: #{pattern_matcher_forward.1} parent=5 // pred_region
        %s938 = ssub.s32 %s14, 2
        // Predicated region
        $region61: #{pattern_matcher_forward.1} parent=59 // pred_check
          %p939 = pneg %p195
        $region62: #{pattern_matcher_forward.1} parent=59 // pred_check_branch
          %941 = sbr.rel (%p939) target = $region64
        $region63: #{pattern_matcher_forward.1} parent=59 // pred_region
          %p942 = scmp.lt.s32.totalorder %s20, 1
          %s943 = scalar_select %p942, %s20, 1
          %s944 = smul.addr %s943, 2
          %s945 = scalar_lea.vmem %s7, %s944
        $region64: #{pattern_matcher_forward.1} parent=59 // pred_fallthru
          _
      $region60: #{pattern_matcher_forward.1} parent=5 // pred_fallthru
        _
    $region6: #{pattern_matcher_forward.1} parent=1 // loop_footer
      %s18 = sadd.s32 1, %s14
    $region7: #{pattern_matcher_forward.1} parent=1 // loop_footer_branch
      %13 = sbr.rel target = $region3
    $region8: #{pattern_matcher_forward.1} parent=1 // loop_exit
      _
    %946 = vsyncpa [#allocation3], 1
    %s947 = scalar_lea.sflag [#allocation3], 1
    %948 = vsyncpa %s947, 1

</llo_original>
